<compile_context>
chip_gen: v7x
topology: tpu7x:2x2x1
jax: 0.10.0
libtpu: 0.0.40
codegen_flags: <defaults>
</compile_context>

<pallas_src>
import functools

import jax
import jax.numpy as jnp
from jax.experimental import pallas as pl
from jax.experimental.pallas import tpu as pltpu


# ---------------------------------------------------------------------------
# Fused SE kernel: global-avg-pool + FC1 + ReLU + FC2 + sigmoid + scale
# ---------------------------------------------------------------------------
def _se_kernel(x_ref, w1_ref, w2_ref, o_ref, *, inv_hw):
    # x_ref : (Nb, C, HW)  Nb images, channels on sublanes, spatial on lanes
    # w1_ref: (C, Ch)      fc1 weight, pre-transposed for right-multiplication
    # w2_ref: (Ch, C)      fc2 weight, pre-transposed

    # Squeeze: global average pool over the spatial/lane axis (f32 accumulate).
    pooled = jnp.sum(x_ref[...].astype(jnp.float32), axis=2) * inv_hw   # (Nb, C)

    # Excite: two tiny bias-free linears (MXU), ReLU, sigmoid (EUP path).
    h = jnp.dot(pooled, w1_ref[...], preferred_element_type=jnp.float32)
    h = jnp.maximum(h, 0.0)                                             # (Nb, Ch)
    z = jnp.dot(h, w2_ref[...], preferred_element_type=jnp.float32)     # (Nb, C)
    s = jax.nn.sigmoid(z)                                               # (Nb, C)

    # Scale: re-read x from VMEM (keeps vreg live ranges short for big blocks)
    # and broadcast the per-channel gate along the lane (spatial) axis.
    o_ref[...] = x_ref[...] * s[:, :, None].astype(o_ref.dtype)


def _choose_batch_block(n, c, hw, itemsize, target_bytes=1 << 20):
    """Largest divisor Nb of N such that the block is ~<= target_bytes and the
    grid keeps >= 2 steps (so both v7x TensorCores get work)."""
    per_image = c * hw * itemsize
    cap = max(1, target_bytes // max(per_image, 1))
    cap = min(cap, max(1, n // 2))          # keep >= 2 grid steps when N > 1
    nb = 1
    for d in range(1, int(cap) + 1):
        if n % d == 0:
            nb = d
    return nb


# ---------------------------------------------------------------------------
# Wrapper (PyTorch-layout weights: w1 = (C//r, C), w2 = (C, C//r))
# ---------------------------------------------------------------------------
@jax.jit
def se_forward(x_nchw, w1, w2):
    """SELayer forward.

    x_nchw : (N, C, H, W)
    w1     : (C//r, C)   nn.Linear(C, C//r, bias=False).weight
    w2     : (C, C//r)   nn.Linear(C//r, C, bias=False).weight
    """
    N, C, H, W = x_nchw.shape
    Ch = w1.shape[0]
    HW = H * W
    dtype = x_nchw.dtype
    itemsize = jnp.dtype(dtype).itemsize

    # Free reshape: H, W are already the trailing contiguous dims of NCHW.
    # No padding, no output slicing -> no extra HBM passes over x.
    x_rows = x_nchw.reshape(N, C, HW)

    # Pre-transpose the tiny FC weights so the kernel right-multiplies.
    w1_t = w1.T.astype(jnp.float32)   # (C, Ch)
    w2_t = w2.T.astype(jnp.float32)   # (Ch, C)

    # Batch Nb images per grid step; keep >= 2 steps for megacore split.
    Nb = _choose_batch_block(N, C, HW, itemsize)
    grid = (N // Nb,)

    # Explicit scoped-VMEM budget: double-buffered in + out blocks + weights,
    # with headroom.  Matters on v5e (16 MiB default) once blocks grow; kept
    # well under v7x's 64 MiB physical VMEM.
    block_bytes = Nb * C * HW * itemsize
    vmem_limit = int(min(max(8 * block_bytes + (4 << 20), 16 << 20), 64 << 20))

    out_rows = pl.pallas_call(
        functools.partial(_se_kernel, inv_hw=1.0 / float(HW)),
        out_shape=jax.ShapeDtypeStruct((N, C, HW), dtype),
        grid_spec=pltpu.PrefetchScalarGridSpec(
            num_scalar_prefetch=0,
            grid=grid,
            in_specs=[
                pl.BlockSpec((Nb, C, HW), lambda b: (b, 0, 0)),  # Nb images/step
                pl.BlockSpec((C, Ch), lambda b: (0, 0)),         # resident weight
                pl.BlockSpec((Ch, C), lambda b: (0, 0)),         # resident weight
            ],
            out_specs=pl.BlockSpec((Nb, C, HW), lambda b: (b, 0, 0)),
        ),
        compiler_params=pltpu.CompilerParams(
            dimension_semantics=("parallel",),   # batch steps split across TCs
            vmem_limit_bytes=vmem_limit,
        ),
    )(x_rows, w1_t, w2_t)

    return out_rows.reshape(N, C, H, W)


# ---------------------------------------------------------------------------
# Pure-JAX reference (correctness sanity check)
# ---------------------------------------------------------------------------
def se_reference(x, w1, w2):
    y = jnp.mean(x.astype(jnp.float32), axis=(2, 3))       # (N, C)
    h = jnp.maximum(y @ w1.T.astype(jnp.float32), 0.0)     # (N, C//r)
    s = jax.nn.sigmoid(h @ w2.T.astype(jnp.float32))       # (N, C)
    return x * s[:, :, None, None].astype(x.dtype)


if __name__ == "__main__":
    # SELayer(channel=32, reduction=16)  (reduction=16 requires C >= 16)
    N, C, H, W, reduction = 8, 32, 16, 16, 16
    Ch = C // reduction

    key = jax.random.PRNGKey(0)
    kx, k1, k2 = jax.random.split(key, 3)

    x = jax.random.normal(kx, (N, C, H, W), dtype=jnp.float32)
    # Deterministic synthetic parameters (shapes per nn.Linear, bias=False).
    w1 = (1.0 / jnp.sqrt(C)) * jax.random.normal(k1, (Ch, C), dtype=jnp.float32)
    w2 = (1.0 / jnp.sqrt(Ch)) * jax.random.normal(k2, (C, Ch), dtype=jnp.float32)

    out = se_forward(x, w1, w2)
    out = jax.block_until_ready(out)

    ref = se_reference(x, w1, w2)
    assert out.shape == (N, C, H, W), out.shape
    assert jnp.allclose(out, ref, atol=1e-5, rtol=1e-5), float(
        jnp.max(jnp.abs(out - ref)))

    print("KERNEL_OK")
</pallas_src>

<mosaic_0001>
module attributes {stable_mosaic.version = 11 : i64} {
  func.func @_se_kernel(%arg0: i32, %arg1: memref<4x32x256xf32, #tpu.memory_space<vmem>>, %arg2: memref<32x2xf32, #tpu.memory_space<vmem>>, %arg3: memref<2x32xf32, #tpu.memory_space<vmem>>, %arg4: memref<4x32x256xf32, #tpu.memory_space<vmem>>) attributes {dimension_semantics = [#tpu.dimension_semantics<parallel>], iteration_bounds = array<i64: 2>, scalar_prefetch = 0 : i64, scratch_operands = 0 : i64, tpu.core_type = #tpu.core_type<tc>, window_params = [{transform_indices = @transform_0, window_bounds = array<i64: 4, 32, 256>}, {pipeline_mode = #tpu.pipeline_mode<synchronous>, transform_indices = @transform_1, window_bounds = array<i64: 32, 2>}, {pipeline_mode = #tpu.pipeline_mode<synchronous>, transform_indices = @transform_2, window_bounds = array<i64: 2, 32>}, {transform_indices = @transform_3, window_bounds = array<i64: 4, 32, 256>}]} {
    %c0 = arith.constant 0 : index
    %c0_0 = arith.constant 0 : index
    %c0_1 = arith.constant 0 : index
    %0 = vector.load %arg1[%c0, %c0_0, %c0_1] : memref<4x32x256xf32, #tpu.memory_space<vmem>>, vector<4x32x256xf32>
    %cst = arith.constant dense<0.000000e+00> : vector<4x32xf32>
    %1 = vector.multi_reduction <add>, %0, %cst [2] : vector<4x32x256xf32> to vector<4x32xf32>
    %cst_2 = arith.constant 3.906250e-03 : f32
    %2 = vector.broadcast %cst_2 : f32 to vector<4x32xf32>
    %3 = arith.mulf %1, %2 : vector<4x32xf32>
    %c0_3 = arith.constant 0 : index
    %c0_4 = arith.constant 0 : index
    %4 = vector.load %arg2[%c0_3, %c0_4] : memref<32x2xf32, #tpu.memory_space<vmem>>, vector<32x2xf32>
    %cst_5 = arith.constant dense<0.000000e+00> : vector<4x2xf32>
    %5 = tpu.matmul %3, %4, %cst_5 {dimension_numbers = #tpu.dot_dimension_numbers<[1], [0], [0], [1], [0, 0, 1, 1], [], []>} : vector<4x32xf32>, vector<32x2xf32>, vector<4x2xf32> -> vector<4x2xf32>
    %cst_6 = arith.constant 0.000000e+00 : f32
    %6 = vector.broadcast %cst_6 : f32 to vector<4x2xf32>
    %7 = arith.maximumf %5, %6 : vector<4x2xf32>
    %c0_7 = arith.constant 0 : index
    %c0_8 = arith.constant 0 : index
    %8 = vector.load %arg3[%c0_7, %c0_8] : memref<2x32xf32, #tpu.memory_space<vmem>>, vector<2x32xf32>
    %cst_9 = arith.constant dense<0.000000e+00> : vector<4x32xf32>
    %9 = tpu.matmul %7, %8, %cst_9 {dimension_numbers = #tpu.dot_dimension_numbers<[1], [0], [0], [1], [0, 0, 1, 1], [], []>} : vector<4x2xf32>, vector<2x32xf32>, vector<4x32xf32> -> vector<4x32xf32>
    %10 = arith.negf %9 : vector<4x32xf32>
    %11 = math.exp %10 : vector<4x32xf32>
    %cst_10 = arith.constant 1.000000e+00 : f32
    %12 = vector.broadcast %cst_10 : f32 to vector<4x32xf32>
    %13 = arith.addf %12, %11 : vector<4x32xf32>
    %14 = arith.divf %12, %13 : vector<4x32xf32>
    %c0_11 = arith.constant 0 : index
    %c0_12 = arith.constant 0 : index
    %c0_13 = arith.constant 0 : index
    %15 = vector.load %arg1[%c0_11, %c0_12, %c0_13] : memref<4x32x256xf32, #tpu.memory_space<vmem>>, vector<4x32x256xf32>
    %16 = vector.shape_cast %14 : vector<4x32xf32> to vector<4x32x1xf32>
    %17 = vector.broadcast %16 : vector<4x32x1xf32> to vector<4x32x256xf32>
    %18 = arith.mulf %15, %17 : vector<4x32x256xf32>
    %c0_14 = arith.constant 0 : index
    %c0_15 = arith.constant 0 : index
    %c0_16 = arith.constant 0 : index
    %19 = vector.load %arg4[%c0_14, %c0_15, %c0_16] : memref<4x32x256xf32, #tpu.memory_space<vmem>>, vector<4x32x256xf32>
    tpu.vector_store %arg4[%c0_14, %c0_15, %c0_16], %18 {strides = array<i32>} : memref<4x32x256xf32, #tpu.memory_space<vmem>>, vector<4x32x256xf32>,
    return
  }
  func.func @transform_0(%arg0: i32) -> (i32, i32, i32) {
    %c0_i32 = arith.constant 0 : i32
    %c0_i32_0 = arith.constant 0 : i32
    %c0_i32_1 = arith.constant 0 : i32
    return %arg0, %c0_i32, %c0_i32_0 : i32, i32, i32
  }
  func.func @transform_1(%arg0: i32) -> (i32, i32) {
    %c0_i32 = arith.constant 0 : i32
    %c0_i32_0 = arith.constant 0 : i32
    %c0_i32_1 = arith.constant 0 : i32
    return %c0_i32, %c0_i32_0 : i32, i32
  }
  func.func @transform_2(%arg0: i32) -> (i32, i32) {
    %c0_i32 = arith.constant 0 : i32
    %c0_i32_0 = arith.constant 0 : i32
    %c0_i32_1 = arith.constant 0 : i32
    return %c0_i32, %c0_i32_0 : i32, i32
  }
  func.func @transform_3(%arg0: i32) -> (i32, i32, i32) {
    %c0_i32 = arith.constant 0 : i32
    %c0_i32_0 = arith.constant 0 : i32
    %c0_i32_1 = arith.constant 0 : i32
    return %arg0, %c0_i32, %c0_i32_0 : i32, i32, i32
  }
}

</mosaic_0001>

<llo_original>
// kernel: se_forward.1
$region0: #{se_forward.1}
  #allocation0 [shape = 'u32[]', space=smem, size = 0x4, offset = 0x4, fixed_abs, tag = 'smem constant byte address 0x4 - core index']
  #allocation1 [shape = 'u32[144,128]{1,0:T(1,128)}', space=vmem, size = 0x12000, scoped, tag = 'internal scratch']
  %s0 = inlined_call_operand.vmem [shape: f32[8,32,256], index: 0, kind: input, shape index: {}]
  %s1 = inlined_call_operand.vmem [shape: f32[32,2], index: 1, kind: input, shape index: {}]
  %s2 = inlined_call_operand.vmem [shape: f32[2,32], index: 2, kind: input, shape index: {}]
  %s3 = inlined_call_operand.vmem [shape: f32[8,32,256], index: 3, kind: output, shape index: {}]
  %s4 = sld [smem:[#allocation0]]
  $region45: #{se_forward.1} parent=0
    _
  %s6 = ssub.s32 1, %s4
  %s7 = scalar_select 0, %s6, %s4
  loop: start=0, step=1, limit=4
  $region2: #{se_forward.1} parent=0 // loop_pre_header
    _
  $region3: #{se_forward.1} parent=0 // loop_header
    %s9 = sphi 0, %s13
    %p10 = scmp.ge.s32.totalorder %s9, 4
    %s19 = sphi 0, %s21
    %s22 = sphi 0, %s19
    %s23 = sphi 0, %s22
    %s39 = sphi 0, %s23
    %s43 = sphi 0, %s43
    %s45 = sphi 0, %s43
    %s46 = sphi 0, %s45
    %s60 = sphi 0, %s46
    %s64 = sphi 0, %s64
    %s66 = sphi 0, %s64
    %s67 = sphi 0, %s66
    %s81 = sphi 0, %s67
    %s87 = sphi 0, %s89
    %s90 = sphi 0, %s87
    %s91 = sphi 0, %s90
    %s107 = sphi 0, %s91
  $region4: #{se_forward.1} parent=0 // loop_header_branch
    %12 = sbr.rel (%p10) target = $region8
  $region5: #{se_forward.1} parent=0 // loop_body
    %s14 = ssub.s32 %s9, 1
    %s15 = ssub.s32 %s9, 2
    %s16 = sadd.s32 %s9, 1
    %s17 = ssub.s32 %s9, %s16
    %p18 = scmp.eq.s32.totalorder %s17, 0
    %s20 = sadd.s32 %s19, 1
    %s21 = scalar_select %p18, %s19, %s20
    %p24 = pneg %p18
    %p25 = scmp.eq.s32.totalorder %s9, 1
    %p26 = por %p24, %p25
    %p27 = scmp.ne.s32.totalorder %s19, %s22
    %p28 = scmp.eq.s32.totalorder %s9, 0
    %p29 = por %p27, %p28
    %p30 = scmp.ne.s32.totalorder %s19, %s22
    %p31 = scmp.eq.s32.totalorder %s14, 1
    %p32 = por %p30, %p31
    %p33 = scmp.ne.s32.totalorder %s22, %s23
    %p34 = scmp.eq.s32.totalorder %s14, 0
    %p35 = por %p33, %p34
    %p36 = scmp.ne.s32.totalorder %s22, %s23
    %p37 = scmp.eq.s32.totalorder %s15, 1
    %p38 = por %p36, %p37
    %p40 = scmp.ne.s32.totalorder %s23, %s39
    %p41 = scmp.eq.s32.totalorder %s15, 0
    %p42 = por %p40, %p41
    %s44 = sadd.s32 %s43, 1
    %p47 = scmp.eq.s32.totalorder %s9, 1
    %p48 = scmp.ne.s32.totalorder %s43, %s45
    %p49 = scmp.eq.s32.totalorder %s9, 0
    %p50 = por %p48, %p49
    %p51 = scmp.ne.s32.totalorder %s43, %s45
    %p52 = scmp.eq.s32.totalorder %s14, 1
    %p53 = por %p51, %p52
    %p54 = scmp.ne.s32.totalorder %s45, %s46
    %p55 = scmp.eq.s32.totalorder %s14, 0
    %p56 = por %p54, %p55
    %p57 = scmp.ne.s32.totalorder %s45, %s46
    %p58 = scmp.eq.s32.totalorder %s15, 1
    %p59 = por %p57, %p58
    %p61 = scmp.ne.s32.totalorder %s46, %s60
    %p62 = scmp.eq.s32.totalorder %s15, 0
    %p63 = por %p61, %p62
    %s65 = sadd.s32 %s64, 1
    %p68 = scmp.eq.s32.totalorder %s9, 1
    %p69 = scmp.ne.s32.totalorder %s64, %s66
    %p70 = scmp.eq.s32.totalorder %s9, 0
    %p71 = por %p69, %p70
    %p72 = scmp.ne.s32.totalorder %s64, %s66
    %p73 = scmp.eq.s32.totalorder %s14, 1
    %p74 = por %p72, %p73
    %p75 = scmp.ne.s32.totalorder %s66, %s67
    %p76 = scmp.eq.s32.totalorder %s14, 0
    %p77 = por %p75, %p76
    %p78 = scmp.ne.s32.totalorder %s66, %s67
    %p79 = scmp.eq.s32.totalorder %s15, 1
    %p80 = por %p78, %p79
    %p82 = scmp.ne.s32.totalorder %s67, %s81
    %p83 = scmp.eq.s32.totalorder %s15, 0
    %p84 = por %p82, %p83
    %s85 = ssub.s32 %s9, %s16
    %p86 = scmp.eq.s32.totalorder %s85, 0
    %s88 = sadd.s32 %s87, 1
    %s89 = scalar_select %p86, %s87, %s88
    %p92 = pneg %p86
    %p93 = scmp.eq.s32.totalorder %s9, 1
    %p94 = por %p92, %p93
    %p95 = scmp.ne.s32.totalorder %s87, %s90
    %p96 = scmp.eq.s32.totalorder %s9, 0
    %p97 = por %p95, %p96
    %p98 = scmp.ne.s32.totalorder %s87, %s90
    %p99 = scmp.eq.s32.totalorder %s14, 1
    %p100 = por %p98, %p99
    %p101 = scmp.ne.s32.totalorder %s90, %s91
    %p102 = scmp.eq.s32.totalorder %s14, 0
    %p103 = por %p101, %p102
    %p104 = scmp.ne.s32.totalorder %s90, %s91
    %p105 = scmp.eq.s32.totalorder %s15, 1
    %p106 = por %p104, %p105
    %p108 = scmp.ne.s32.totalorder %s91, %s107
    %p109 = scmp.eq.s32.totalorder %s15, 0
    %p110 = por %p108, %p109
    %p111 = scmp.le.s32.totalorder 1, %s9
    %p112 = scmp.lt.s32.totalorder %s9, 3
    %p113 = pnand %p111, %p112
    %p114 = pneg %p113
    // Predicated region
    $region9: #{se_forward.1} parent=5 // pred_check
      _
    $region10: #{se_forward.1} parent=5 // pred_check_branch
      %116 = sbr.rel (%p113) target = $region12
    $region11: #{se_forward.1} parent=5 // pred_region
      %s117 = ssub.s32 %s9, 1
      // Predicated region
      $region13: #{se_forward.1} parent=11 // pred_check
        %p118 = pneg %p56
      $region14: #{se_forward.1} parent=11 // pred_check_branch
        %120 = sbr.rel (%p118) target = $region16
      $region15: #{se_forward.1} parent=11 // pred_region
        _
      $region16: #{se_forward.1} parent=11 // pred_fallthru
        _
      // Predicated region
      $region17: #{se_forward.1} parent=11 // pred_check
        %p121 = pneg %p77
      $region18: #{se_forward.1} parent=11 // pred_check_branch
        %123 = sbr.rel (%p121) target = $region20
      $region19: #{se_forward.1} parent=11 // pred_region
        _
      $region20: #{se_forward.1} parent=11 // pred_fallthru
        _
    $region12: #{se_forward.1} parent=5 // pred_fallthru
      _
    %p124 = scmp.lt.s32.totalorder %s9, 2
    // Predicated region
    $region21: #{se_forward.1} parent=5 // pred_check
      %p125 = pneg %p124
    $region22: #{se_forward.1} parent=5 // pred_check_branch
      %127 = sbr.rel (%p125) target = $region24
    $region23: #{se_forward.1} parent=5 // pred_region
      // Predicated region
      $region25: #{se_forward.1} parent=23 // pred_check
        %p128 = pneg %p29
      $region26: #{se_forward.1} parent=23 // pred_check_branch
        %130 = sbr.rel (%p128) target = $region28
      $region27: #{se_forward.1} parent=23 // pred_region
        %s131 = smul.u32 4, %s9
        %p132 = scmp.lt.s32.totalorder %s131, 7
        %s133 = scalar_select %p132, %s131, 7
        %s134 = smul.addr %s133, 8
        %s135 = smul.addr %s134, 8
        %s136 = scalar_lea.vmem %s0, %s135
        %s137 = smul.u32 4, %s9
      $region28: #{se_forward.1} parent=23 // pred_fallthru
        _
    $region24: #{se_forward.1} parent=5 // pred_fallthru
      _
    %p138 = scmp.le.s32.totalorder 1, %s9
    %p139 = scmp.lt.s32.totalorder %s9, 3
    %p140 = pnand %p138, %p139
    %p141 = pneg %p140
    // Predicated region
    $region29: #{se_forward.1} parent=5 // pred_check
      _
    $region30: #{se_forward.1} parent=5 // pred_check_branch
      %143 = sbr.rel (%p140) target = $region32
    $region31: #{se_forward.1} parent=5 // pred_region
      %s144 = ssub.s32 %s9, 1
      %s145 = smul.u32 4, %s14
      %p146 = scmp.lt.s32.totalorder %s145, 7
      %s147 = scalar_select %p146, %s145, 7
      %s148 = smul.addr %s147, 8
      %s149 = smul.addr %s148, 8
      %s150 = scalar_lea.vmem %s0, %s149
      %p151 = pneg %p35
      %p152 = pneg %p32
      %p153 = pneg %p56
      %p154 = pneg %p53
      %p155 = pneg %p77
      %p156 = pneg %p74
      %p157 = pneg %p103
      %p158 = pneg %p100
      %s159 = smul.u32 4, %s14
      %p160 = scmp.lt.s32.totalorder %s159, 7
      %s161 = scalar_select %p160, %s159, 7
      %s162 = smul.addr %s161, 8
      %s163 = smul.addr %s162, 8
      %s164 = scalar_lea.vmem %s3, %s163
      %s165 = smul.u32 4, %s14
      %p166 = scmp.lt.s32.totalorder %s165, 7
      %s167 = scalar_select %p166, %s165, 7
      %s168 = smul.addr %s167, 8
      %s169 = smul.addr %s168, 8
      %s170 = scalar_lea.vmem %s0, %s169
      %s171 = smul.u32 4, %s14
      %s172 = smul.u32 4, %s14
      %p173 = scmp.lt.s32.totalorder %s172, 7
      %s174 = scalar_select %p173, %s172, 7
      %s175 = smul.addr %s174, 8
      %s176 = smul.addr %s175, 8
      %s177 = scalar_lea.vmem %s3, %s176
      %s178 = smul.u32 4, %s14
      %v179 = vld [vmem:[%s170] sm:$0xff]
      %v180 = vld [vmem:[%s170 + $0x8] sm:$0xff]
      %v181 = vld [vmem:[%s170 + $0x10] sm:$0xff]
      %v182 = vld [vmem:[%s170 + $0x18] sm:$0xff]
      %v183 = vld [vmem:[%s170 + $0x20] sm:$0xff]
      %v184 = vld [vmem:[%s170 + $0x28] sm:$0xff]
      %v185 = vld [vmem:[%s170 + $0x30] sm:$0xff]
      %v186 = vld [vmem:[%s170 + $0x38] sm:$0xff]
      %v187 = vld [vmem:[%s170 + $0x40] sm:$0xff]
      %v188 = vld [vmem:[%s170 + $0x48] sm:$0xff]
      %v189 = vld [vmem:[%s170 + $0x50] sm:$0xff]
      %v190 = vld [vmem:[%s170 + $0x58] sm:$0xff]
      %v191 = vld [vmem:[%s170 + $0x60] sm:$0xff]
      %v192 = vld [vmem:[%s170 + $0x68] sm:$0xff]
      %v193 = vld [vmem:[%s170 + $0x70] sm:$0xff]
      %v194 = vld [vmem:[%s170 + $0x78] sm:$0xff]
      %v195 = vld [vmem:[%s170 + $0x80] sm:$0xff]
      %v196 = vld [vmem:[%s170 + $0x88] sm:$0xff]
      %v197 = vld [vmem:[%s170 + $0x90] sm:$0xff]
      %v198 = vld [vmem:[%s170 + $0x98] sm:$0xff]
      %v199 = vld [vmem:[%s170 + $0xa0] sm:$0xff]
      %v200 = vld [vmem:[%s170 + $0xa8] sm:$0xff]
      %v201 = vld [vmem:[%s170 + $0xb0] sm:$0xff]
      %v202 = vld [vmem:[%s170 + $0xb8] sm:$0xff]
      %v203 = vld [vmem:[%s170 + $0xc0] sm:$0xff]
      %v204 = vld [vmem:[%s170 + $0xc8] sm:$0xff]
      %v205 = vld [vmem:[%s170 + $0xd0] sm:$0xff]
      %v206 = vld [vmem:[%s170 + $0xd8] sm:$0xff]
      %v207 = vld [vmem:[%s170 + $0xe0] sm:$0xff]
      %v208 = vld [vmem:[%s170 + $0xe8] sm:$0xff]
      %v209 = vld [vmem:[%s170 + $0xf0] sm:$0xff]
      %v210 = vld [vmem:[%s170 + $0xf8] sm:$0xff]
      %v211 = vadd.f32 %v179, %v180
      %212 = vadd.xlane.f32.xlu0 %v211
      %v213 = vpop.xlane.xlu0 %212
      %v214 = vadd.f32 %v181, %v182
      %215 = vadd.xlane.f32.xlu0 %v214
      %v216 = vpop.xlane.xlu0 %215
      %v217 = vadd.f32 %v183, %v184
      %218 = vadd.xlane.f32.xlu0 %v217
      %v219 = vpop.xlane.xlu0 %218
      %v220 = vadd.f32 %v185, %v186
      %221 = vadd.xlane.f32.xlu0 %v220
      %v222 = vpop.xlane.xlu0 %221
      %v223 = vadd.f32 %v187, %v188
      %224 = vadd.xlane.f32.xlu0 %v223
      %v225 = vpop.xlane.xlu0 %224
      %v226 = vadd.f32 %v189, %v190
      %227 = vadd.xlane.f32.xlu0 %v226
      %v228 = vpop.xlane.xlu0 %227
      %v229 = vadd.f32 %v191, %v192
      %230 = vadd.xlane.f32.xlu0 %v229
      %v231 = vpop.xlane.xlu0 %230
      %v232 = vadd.f32 %v193, %v194
      %233 = vadd.xlane.f32.xlu0 %v232
      %v234 = vpop.xlane.xlu0 %233
      %v235 = vadd.f32 %v195, %v196
      %236 = vadd.xlane.f32.xlu0 %v235
      %v237 = vpop.xlane.xlu0 %236
      %v238 = vadd.f32 %v197, %v198
      %239 = vadd.xlane.f32.xlu0 %v238
      %v240 = vpop.xlane.xlu0 %239
      %v241 = vadd.f32 %v199, %v200
      %242 = vadd.xlane.f32.xlu0 %v241
      %v243 = vpop.xlane.xlu0 %242
      %v244 = vadd.f32 %v201, %v202
      %245 = vadd.xlane.f32.xlu0 %v244
      %v246 = vpop.xlane.xlu0 %245
      %v247 = vadd.f32 %v203, %v204
      %248 = vadd.xlane.f32.xlu0 %v247
      %v249 = vpop.xlane.xlu0 %248
      %v250 = vadd.f32 %v205, %v206
      %251 = vadd.xlane.f32.xlu0 %v250
      %v252 = vpop.xlane.xlu0 %251
      %v253 = vadd.f32 %v207, %v208
      %254 = vadd.xlane.f32.xlu0 %v253
      %v255 = vpop.xlane.xlu0 %254
      %v256 = vadd.f32 %v209, %v210
      %257 = vadd.xlane.f32.xlu0 %v256
      %v258 = vpop.xlane.xlu0 %257
      %v259 = vmul.f32 %v213, 0.00390625
      %v260 = vmul.f32 %v216, 0.00390625
      %v261 = vmul.f32 %v219, 0.00390625
      %v262 = vmul.f32 %v222, 0.00390625
      %v263 = vmul.f32 %v225, 0.00390625
      %v264 = vmul.f32 %v228, 0.00390625
      %v265 = vmul.f32 %v231, 0.00390625
      %v266 = vmul.f32 %v234, 0.00390625
      %v267 = vmul.f32 %v237, 0.00390625
      %v268 = vmul.f32 %v240, 0.00390625
      %v269 = vmul.f32 %v243, 0.00390625
      %v270 = vmul.f32 %v246, 0.00390625
      %v271 = vmul.f32 %v249, 0.00390625
      %v272 = vmul.f32 %v252, 0.00390625
      %v273 = vmul.f32 %v255, 0.00390625
      %v274 = vmul.f32 %v258, 0.00390625
      %v275 = vld [vmem:[%s1] sm:$0xff]
      %v276 = vld [vmem:[%s1 + $0x8] sm:$0xff]
      %v277 = vld [vmem:[%s1 + $0x10] sm:$0xff]
      %v278 = vld [vmem:[%s1 + $0x18] sm:$0xff]
      %v295 = vlaneseq
      %v296 = vand.u32 %v295, 127
      %v297 = vlaneseq
      %v298 = vshrl.u32 %v297, 7
      %v299 = vsub.s32 %v296, %v298
      %v300 = vrot.slane %v259, %v299
      %v301 = vadd.s32 %v296, 4294967288
      %v302 = vlaneseq
      %v303 = vshrl.u32 %v302, 7
      %v304 = vsub.s32 %v301, %v303
      %v305 = vrot.slane %v260, %v304
      %vm306 = vcmask 130112
      %v307 = vsel %vm306, %v305, %v300
      %v308 = vadd.s32 %v296, 4294967280
      %v309 = vlaneseq
      %v310 = vshrl.u32 %v309, 7
      %v311 = vsub.s32 %v308, %v310
      %v312 = vrot.slane %v261, %v311
      %vm313 = vcmask 195712
      %v314 = vsel %vm313, %v312, %v307
      %v315 = vadd.s32 %v296, 4294967272
      %v316 = vlaneseq
      %v317 = vshrl.u32 %v316, 7
      %v318 = vsub.s32 %v315, %v317
      %v319 = vrot.slane %v262, %v318
      %vm320 = vcmask 261312
      %v321 = vsel %vm320, %v319, %v314
      %v322 = vlaneseq
      %v323 = vshrl.u32 %v322, 7
      %v324 = vsub.s32 %v296, %v323
      %v325 = vrot.slane %v263, %v324
      %v326 = vlaneseq
      %v327 = vshrl.u32 %v326, 7
      %v328 = vsub.s32 %v301, %v327
      %v329 = vrot.slane %v264, %v328
      %v330 = vsel %vm306, %v329, %v325
      %v331 = vlaneseq
      %v332 = vshrl.u32 %v331, 7
      %v333 = vsub.s32 %v308, %v332
      %v334 = vrot.slane %v265, %v333
      %v335 = vsel %vm313, %v334, %v330
      %v336 = vlaneseq
      %v337 = vshrl.u32 %v336, 7
      %v338 = vsub.s32 %v315, %v337
      %v339 = vrot.slane %v266, %v338
      %v340 = vsel %vm320, %v339, %v335
      %v341 = vlaneseq
      %v342 = vshrl.u32 %v341, 7
      %v343 = vsub.s32 %v296, %v342
      %v344 = vrot.slane %v267, %v343
      %v345 = vlaneseq
      %v346 = vshrl.u32 %v345, 7
      %v347 = vsub.s32 %v301, %v346
      %v348 = vrot.slane %v268, %v347
      %v349 = vsel %vm306, %v348, %v344
      %v350 = vlaneseq
      %v351 = vshrl.u32 %v350, 7
      %v352 = vsub.s32 %v308, %v351
      %v353 = vrot.slane %v269, %v352
      %v354 = vsel %vm313, %v353, %v349
      %v355 = vlaneseq
      %v356 = vshrl.u32 %v355, 7
      %v357 = vsub.s32 %v315, %v356
      %v358 = vrot.slane %v270, %v357
      %v359 = vsel %vm320, %v358, %v354
      %v360 = vlaneseq
      %v361 = vshrl.u32 %v360, 7
      %v362 = vsub.s32 %v296, %v361
      %v363 = vrot.slane %v271, %v362
      %v364 = vlaneseq
      %v365 = vshrl.u32 %v364, 7
      %v366 = vsub.s32 %v301, %v365
      %v367 = vrot.slane %v272, %v366
      %v368 = vsel %vm306, %v367, %v363
      %v369 = vlaneseq
      %v370 = vshrl.u32 %v369, 7
      %v371 = vsub.s32 %v308, %v370
      %v372 = vrot.slane %v273, %v371
      %v373 = vsel %vm313, %v372, %v368
      %v374 = vlaneseq
      %v375 = vshrl.u32 %v374, 7
      %v376 = vsub.s32 %v315, %v375
      %v377 = vrot.slane %v274, %v376
      %v378 = vsel %vm320, %v377, %v373
      %vm379 = vcmask 1041409
      %v380 = vsel %vm379, %v340, %v321
      %vm381 = vcmask 1042434
      %v382 = vsel %vm381, %v359, %v380
      %vm383 = vcmask 1043459
      %v384 = vsel %vm383, %v378, %v382
      %vm385 = vcmask 261120
      %v386 = vsel %vm385, %v384, 0
      %388 = vmatprep.subr.mxu0 0.0
      %389 = vmatpush1.msra.mxu0 %v275
      %390 = vmatprep.subr.mxu0 0.0
      %391 = vmatpush1.msra.mxu0 %v276
      %392 = vmatprep.subr.mxu0 0.0
      %393 = vmatpush1.msra.mxu0 %v277
      %394 = vmatprep.subr.mxu0 0.0
      %395 = vmatpush1.msra.mxu0 %v278
      %396 = vmatprep.subr.mxu0 0.0
      %397 = vmatpush1.msra.mxu0 0.0
      %398 = vmatprep.subr.mxu0 0.0
      %399 = vmatpush1.msra.mxu0 0.0
      %400 = vmatprep.subr.mxu0 0.0
      %401 = vmatpush1.msra.mxu0 0.0
      %402 = vmatprep.subr.mxu0 0.0
      %403 = vmatpush1.msra.mxu0 0.0
      %404 = vmatprep.subr.mxu0 0.0
      %405 = vmatpush1.msra.mxu0 0.0
      %406 = vmatprep.subr.mxu0 0.0
      %407 = vmatpush1.msra.mxu0 0.0
      %408 = vmatprep.subr.mxu0 0.0
      %409 = vmatpush1.msra.mxu0 0.0
      %410 = vmatprep.subr.mxu0 0.0
      %411 = vmatpush1.msra.mxu0 0.0
      %412 = vmatprep.subr.mxu0 0.0
      %413 = vmatpush1.msra.mxu0 0.0
      %414 = vmatprep.subr.mxu0 0.0
      %415 = vmatpush1.msra.mxu0 0.0
      %416 = vmatprep.subr.mxu0 0.0
      %417 = vmatpush1.msra.mxu0 0.0
      %418 = vmatprep.subr.mxu0 0.0
      %419 = vmatpush1.msra.mxu0 0.0
      %420 = vmatprep.subr.mxu0 0.0
      %421 = vmatpush1.msra.mxu0 0.0
      %422 = vmatprep.subr.mxu0 0.0
      %423 = vmatpush1.msra.mxu0 0.0
      %424 = vmatprep.subr.mxu0 0.0
      %425 = vmatpush1.msra.mxu0 0.0
      %426 = vmatprep.subr.mxu0 0.0
      %427 = vmatpush1.msra.mxu0 0.0
      %428 = vmatprep.subr.mxu0 0.0
      %429 = vmatpush1.msra.mxu0 0.0
      %430 = vmatprep.subr.mxu0 0.0
      %431 = vmatpush1.msra.mxu0 0.0
      %432 = vmatprep.subr.mxu0 0.0
      %433 = vmatpush1.msra.mxu0 0.0
      %434 = vmatprep.subr.mxu0 0.0
      %435 = vmatpush1.msra.mxu0 0.0
      %436 = vmatprep.subr.mxu0 0.0
      %437 = vmatpush1.msra.mxu0 0.0
      %438 = vmatprep.subr.mxu0 0.0
      %439 = vmatpush1.msra.mxu0 0.0
      %440 = vmatprep.subr.mxu0 0.0
      %441 = vmatpush1.msra.mxu0 0.0
      %442 = vmatprep.subr.mxu0 0.0
      %443 = vmatpush1.msra.mxu0 0.0
      %444 = vmatprep.subr.mxu0 0.0
      %445 = vmatpush1.msra.mxu0 0.0
      %446 = vmatprep.subr.mxu0 0.0
      %447 = vmatpush1.msra.mxu0 0.0
      %448 = vmatprep.subr.mxu0 0.0
      %449 = vmatpush1.msra.mxu0 0.0
      %450 = vmatprep.subr.mxu0 0.0
      %451 = vmatpush1.msra.mxu0 0.0
      %452 = vmatprep.mubr.f32.mxu0 0.0
      %453 = vmatmul.mubr.f32.gmra.mrb[0].mxu0 %v386
      %v454 = vpop.f32.mrb[0].mxu0
      %v455 = vadd.f32 0.0, %v454
      %v456 = vpop.f32.mrb[0].mxu0
      %457 = vdwg.mxu0
      %v458 = vmax.f32 %v455, 0.0
      %v459 = vld [vmem:[%s2] sm:$0x3]
      %vm460 = vcmask 15360
      %v462 = vsel %vm460, %v458, 0
      %vm464 = vcmask 1041408
      %v466 = vsel %vm464, %v459, 0
      %468 = vmatprep.subr.mxu0 0.0
      %469 = vmatpush1.msra.mxu0 %v466
      %470 = vmatprep.subr.mxu0 0.0
      %471 = vmatpush1.msra.mxu0 0.0
      %472 = vmatprep.subr.mxu0 0.0
      %473 = vmatpush1.msra.mxu0 0.0
      %474 = vmatprep.subr.mxu0 0.0
      %475 = vmatpush1.msra.mxu0 0.0
      %476 = vmatprep.subr.mxu0 0.0
      %477 = vmatpush1.msra.mxu0 0.0
      %478 = vmatprep.subr.mxu0 0.0
      %479 = vmatpush1.msra.mxu0 0.0
      %480 = vmatprep.subr.mxu0 0.0
      %481 = vmatpush1.msra.mxu0 0.0
      %482 = vmatprep.subr.mxu0 0.0
      %483 = vmatpush1.msra.mxu0 0.0
      %484 = vmatprep.subr.mxu0 0.0
      %485 = vmatpush1.msra.mxu0 0.0
      %486 = vmatprep.subr.mxu0 0.0
      %487 = vmatpush1.msra.mxu0 0.0
      %488 = vmatprep.subr.mxu0 0.0
      %489 = vmatpush1.msra.mxu0 0.0
      %490 = vmatprep.subr.mxu0 0.0
      %491 = vmatpush1.msra.mxu0 0.0
      %492 = vmatprep.subr.mxu0 0.0
      %493 = vmatpush1.msra.mxu0 0.0
      %494 = vmatprep.subr.mxu0 0.0
      %495 = vmatpush1.msra.mxu0 0.0
      %496 = vmatprep.subr.mxu0 0.0
      %497 = vmatpush1.msra.mxu0 0.0
      %498 = vmatprep.subr.mxu0 0.0
      %499 = vmatpush1.msra.mxu0 0.0
      %500 = vmatprep.subr.mxu0 0.0
      %501 = vmatpush1.msra.mxu0 0.0
      %502 = vmatprep.subr.mxu0 0.0
      %503 = vmatpush1.msra.mxu0 0.0
      %504 = vmatprep.subr.mxu0 0.0
      %505 = vmatpush1.msra.mxu0 0.0
      %506 = vmatprep.subr.mxu0 0.0
      %507 = vmatpush1.msra.mxu0 0.0
      %508 = vmatprep.subr.mxu0 0.0
      %509 = vmatpush1.msra.mxu0 0.0
      %510 = vmatprep.subr.mxu0 0.0
      %511 = vmatpush1.msra.mxu0 0.0
      %512 = vmatprep.subr.mxu0 0.0
      %513 = vmatpush1.msra.mxu0 0.0
      %514 = vmatprep.subr.mxu0 0.0
      %515 = vmatpush1.msra.mxu0 0.0
      %516 = vmatprep.subr.mxu0 0.0
      %517 = vmatpush1.msra.mxu0 0.0
      %518 = vmatprep.subr.mxu0 0.0
      %519 = vmatpush1.msra.mxu0 0.0
      %520 = vmatprep.subr.mxu0 0.0
      %521 = vmatpush1.msra.mxu0 0.0
      %522 = vmatprep.subr.mxu0 0.0
      %523 = vmatpush1.msra.mxu0 0.0
      %524 = vmatprep.subr.mxu0 0.0
      %525 = vmatpush1.msra.mxu0 0.0
      %526 = vmatprep.subr.mxu0 0.0
      %527 = vmatpush1.msra.mxu0 0.0
      %528 = vmatprep.subr.mxu0 0.0
      %529 = vmatpush1.msra.mxu0 0.0
      %530 = vmatprep.subr.mxu0 0.0
      %531 = vmatpush1.msra.mxu0 0.0
      %532 = vmatprep.mubr.f32.mxu0 0.0
      %533 = vmatmul.mubr.f32.gmra.mrb[0].mxu0 %v462
      %v534 = vpop.f32.mrb[0].mxu0
      %v535 = vadd.f32 0.0, %v534
      %v536 = vpop.f32.mrb[0].mxu0
      %537 = vdwg.mxu0
      %v538 = vxor.u32 %v535, 2147483648
      %v539 = vmul.f32 %v538, 1.442695
      %v540 = vpow.pop %v539
      %v541 = vadd.f32 %v540, 1.0
      %v542 = vrcp.pop %v541
      %v543 = vmul.f32 1.0, %v542
      %v544 = vlaneseq
      %v545 = vshrl.u32 %v544, 7
      %v546 = vsub.s32 0, %v545
      %v547 = vrot.slane %v543, %v546
      %549 = vbcast.lane.b32.xlu0 %v547, 256
      %v550 = vpop.permute.xlu0 %549
      %s552 = sor.u32 256, 8
      %553 = vbcast.lane.b32.xlu0 %v547, %s552
      %v554 = vpop.permute.xlu0 %553
      %s556 = sor.u32 256, 16
      %557 = vbcast.lane.b32.xlu0 %v547, %s556
      %v558 = vpop.permute.xlu0 %557
      %s560 = sor.u32 256, 24
      %561 = vbcast.lane.b32.xlu0 %v547, %s560
      %v562 = vpop.permute.xlu0 %561
      %v563 = vlaneseq
      %v564 = vshrl.u32 %v563, 7
      %v565 = vsub.s32 1, %v564
      %v566 = vrot.slane %v543, %v565
      %568 = vbcast.lane.b32.xlu0 %v566, 256
      %v569 = vpop.permute.xlu0 %568
      %s571 = sor.u32 256, 8
      %572 = vbcast.lane.b32.xlu0 %v566, %s571
      %v573 = vpop.permute.xlu0 %572
      %s575 = sor.u32 256, 16
      %576 = vbcast.lane.b32.xlu0 %v566, %s575
      %v577 = vpop.permute.xlu0 %576
      %s579 = sor.u32 256, 24
      %580 = vbcast.lane.b32.xlu0 %v566, %s579
      %v581 = vpop.permute.xlu0 %580
      %v582 = vlaneseq
      %v583 = vshrl.u32 %v582, 7
      %v584 = vsub.s32 2, %v583
      %v585 = vrot.slane %v543, %v584
      %587 = vbcast.lane.b32.xlu0 %v585, 256
      %v588 = vpop.permute.xlu0 %587
      %s590 = sor.u32 256, 8
      %591 = vbcast.lane.b32.xlu0 %v585, %s590
      %v592 = vpop.permute.xlu0 %591
      %s594 = sor.u32 256, 16
      %595 = vbcast.lane.b32.xlu0 %v585, %s594
      %v596 = vpop.permute.xlu0 %595
      %s598 = sor.u32 256, 24
      %599 = vbcast.lane.b32.xlu0 %v585, %s598
      %v600 = vpop.permute.xlu0 %599
      %v601 = vlaneseq
      %v602 = vshrl.u32 %v601, 7
      %v603 = vsub.s32 3, %v602
      %v604 = vrot.slane %v543, %v603
      %606 = vbcast.lane.b32.xlu0 %v604, 256
      %v607 = vpop.permute.xlu0 %606
      %s609 = sor.u32 256, 8
      %610 = vbcast.lane.b32.xlu0 %v604, %s609
      %v611 = vpop.permute.xlu0 %610
      %s613 = sor.u32 256, 16
      %614 = vbcast.lane.b32.xlu0 %v604, %s613
      %v615 = vpop.permute.xlu0 %614
      %s617 = sor.u32 256, 24
      %618 = vbcast.lane.b32.xlu0 %v604, %s617
      %v619 = vpop.permute.xlu0 %618
      %v620 = vmul.f32 %v179, %v550
      %v621 = vmul.f32 %v180, %v550
      %v622 = vmul.f32 %v181, %v554
      %v623 = vmul.f32 %v182, %v554
      %v624 = vmul.f32 %v183, %v558
      %v625 = vmul.f32 %v184, %v558
      %v626 = vmul.f32 %v185, %v562
      %v627 = vmul.f32 %v186, %v562
      %v628 = vmul.f32 %v187, %v569
      %v629 = vmul.f32 %v188, %v569
      %v630 = vmul.f32 %v189, %v573
      %v631 = vmul.f32 %v190, %v573
      %v632 = vmul.f32 %v191, %v577
      %v633 = vmul.f32 %v192, %v577
      %v634 = vmul.f32 %v193, %v581
      %v635 = vmul.f32 %v194, %v581
      %v636 = vmul.f32 %v195, %v588
      %v637 = vmul.f32 %v196, %v588
      %v638 = vmul.f32 %v197, %v592
      %v639 = vmul.f32 %v198, %v592
      %v640 = vmul.f32 %v199, %v596
      %v641 = vmul.f32 %v200, %v596
      %v642 = vmul.f32 %v201, %v600
      %v643 = vmul.f32 %v202, %v600
      %v644 = vmul.f32 %v203, %v607
      %v645 = vmul.f32 %v204, %v607
      %v646 = vmul.f32 %v205, %v611
      %v647 = vmul.f32 %v206, %v611
      %v648 = vmul.f32 %v207, %v615
      %v649 = vmul.f32 %v208, %v615
      %v650 = vmul.f32 %v209, %v619
      %v651 = vmul.f32 %v210, %v619
      %652 = vst [vmem:[%s177] sm:$0xff] %v620
      %653 = vst [vmem:[%s177 + $0x8] sm:$0xff] %v621
      %654 = vst [vmem:[%s177 + $0x10] sm:$0xff] %v622
      %655 = vst [vmem:[%s177 + $0x18] sm:$0xff] %v623
      %656 = vst [vmem:[%s177 + $0x20] sm:$0xff] %v624
      %657 = vst [vmem:[%s177 + $0x28] sm:$0xff] %v625
      %658 = vst [vmem:[%s177 + $0x30] sm:$0xff] %v626
      %659 = vst [vmem:[%s177 + $0x38] sm:$0xff] %v627
      %660 = vst [vmem:[%s177 + $0x40] sm:$0xff] %v628
      %661 = vst [vmem:[%s177 + $0x48] sm:$0xff] %v629
      %662 = vst [vmem:[%s177 + $0x50] sm:$0xff] %v630
      %663 = vst [vmem:[%s177 + $0x58] sm:$0xff] %v631
      %664 = vst [vmem:[%s177 + $0x60] sm:$0xff] %v632
      %665 = vst [vmem:[%s177 + $0x68] sm:$0xff] %v633
      %666 = vst [vmem:[%s177 + $0x70] sm:$0xff] %v634
      %667 = vst [vmem:[%s177 + $0x78] sm:$0xff] %v635
      %668 = vst [vmem:[%s177 + $0x80] sm:$0xff] %v636
      %669 = vst [vmem:[%s177 + $0x88] sm:$0xff] %v637
      %670 = vst [vmem:[%s177 + $0x90] sm:$0xff] %v638
      %671 = vst [vmem:[%s177 + $0x98] sm:$0xff] %v639
      %672 = vst [vmem:[%s177 + $0xa0] sm:$0xff] %v640
      %673 = vst [vmem:[%s177 + $0xa8] sm:$0xff] %v641
      %674 = vst [vmem:[%s177 + $0xb0] sm:$0xff] %v642
      %675 = vst [vmem:[%s177 + $0xb8] sm:$0xff] %v643
      %676 = vst [vmem:[%s177 + $0xc0] sm:$0xff] %v644
      %677 = vst [vmem:[%s177 + $0xc8] sm:$0xff] %v645
      %678 = vst [vmem:[%s177 + $0xd0] sm:$0xff] %v646
      %679 = vst [vmem:[%s177 + $0xd8] sm:$0xff] %v647
      %680 = vst [vmem:[%s177 + $0xe0] sm:$0xff] %v648
      %681 = vst [vmem:[%s177 + $0xe8] sm:$0xff] %v649
      %682 = vst [vmem:[%s177 + $0xf0] sm:$0xff] %v650
      %683 = vst [vmem:[%s177 + $0xf8] sm:$0xff] %v651
      %s684 = smul.u32 4, %s14
      %p685 = scmp.lt.s32.totalorder %s684, 7
      %s686 = scalar_select %p685, %s684, 7
      %s687 = smul.addr %s686, 8
      %s688 = smul.addr %s687, 8
      %s689 = scalar_lea.vmem %s3, %s688
      // Predicated region
      $region33: #{se_forward.1} parent=31 // pred_check
        %p690 = pneg %p100
      $region34: #{se_forward.1} parent=31 // pred_check_branch
        %692 = sbr.rel (%p690) target = $region36
      $region35: #{se_forward.1} parent=31 // pred_region
        %s693 = smul.u32 4, %s14
      $region36: #{se_forward.1} parent=31 // pred_fallthru
        _
    $region32: #{se_forward.1} parent=5 // pred_fallthru
      _
    %p694 = scmp.le.s32.totalorder 2, %s9
    // Predicated region
    $region37: #{se_forward.1} parent=5 // pred_check
      %p695 = pneg %p694
    $region38: #{se_forward.1} parent=5 // pred_check_branch
      %697 = sbr.rel (%p695) target = $region40
    $region39: #{se_forward.1} parent=5 // pred_region
      %s698 = ssub.s32 %s9, 2
      // Predicated region
      $region41: #{se_forward.1} parent=39 // pred_check
        %p699 = pneg %p106
      $region42: #{se_forward.1} parent=39 // pred_check_branch
        %701 = sbr.rel (%p699) target = $region44
      $region43: #{se_forward.1} parent=39 // pred_region
        %s702 = smul.u32 4, %s15
        %p703 = scmp.lt.s32.totalorder %s702, 7
        %s704 = scalar_select %p703, %s702, 7
        %s705 = smul.addr %s704, 8
        %s706 = smul.addr %s705, 8
        %s707 = scalar_lea.vmem %s3, %s706
      $region44: #{se_forward.1} parent=39 // pred_fallthru
        _
    $region40: #{se_forward.1} parent=5 // pred_fallthru
      _
  $region6: #{se_forward.1} parent=0 // loop_footer
    %s13 = sadd.s32 1, %s9
  $region7: #{se_forward.1} parent=0 // loop_footer_branch
    %8 = sbr.rel target = $region3
  $region8: #{se_forward.1} parent=0 // loop_exit
    _

</llo_original>
